<compile_context>
chip_gen: v7x
topology: tpu7x:2x2x1
jax: 0.10.0
libtpu: 0.0.40
codegen_flags: <defaults>
</compile_context>

<pallas_src>
import jax
import jax.numpy as jnp
from jax.experimental import pallas as pl
from jax.experimental.pallas import tpu as pltpu

HIDDEN = 768   # BERT sentence-embedding dim
MID = 200      # nn.Linear(768, 200)
OUT = 1        # nn.Linear(200, 1)


def _round_up(x, m):
    return ((x + m - 1) // m) * m


def siamese_head_kernel(e1_ref, e2_ref, w_ref, b_ref, o_ref):
    """One batch tile: [TB, 768] bf16 embeddings -> [TB, 1] f32 probabilities."""
    # Squared elementwise distance, computed in f32 (v5e-safe: no bf16 VPU/EUP).
    d = e1_ref[...].astype(jnp.float32) - e2_ref[...].astype(jnp.float32)
    d = d * d                                              # [TB, 768]
    # Fused head: logits = d @ W_eff + b_eff, done as a VPU broadcast-multiply
    # plus an XLU lane reduction (no MXU, no N=1 matmul, no W1 DMA).
    w = w_ref[...]                                         # [1, 768] f32, resident
    logits = jnp.sum(d * w, axis=-1, keepdims=True)        # [TB, 1]
    logits = logits + b_ref[0, 0]                          # scalar bias from SMEM
    # Stable sigmoid; exp/tanh go to the EUP (free bundle slot).
    o_ref[...] = jax.nn.sigmoid(logits)
    # NOTE: the [TB, 1] store is lane-sparse, but post-fusion the output is
    # <0.1% of the bytes moved per tile, so it is not on the critical path.


def siamese_bert_forward(e1, e2, w1, b1, w2, b2, *, block_b=1024):
    """e1, e2: [B, 768] embeddings (output of the BERT encoder).

    Weights use (in_features, out_features) layout: w1 [768, 200], b1 [1, 200],
    w2 [200, 1], b2 [1, 1].  PyTorch nn.Linear stores (out, in) -- transpose
    when porting.
    """
    B = e1.shape[0]
    assert e1.shape == (B, HIDDEN) and e2.shape == (B, HIDDEN)
    assert w1.shape == (HIDDEN, MID) and b1.shape == (1, MID)
    assert w2.shape == (MID, OUT) and b2.shape == (1, OUT)

    # Fuse the two Linear layers (no activation between them in the reference):
    # logits = d @ (W1 @ W2) + (b1 @ W2 + b2).  Precomputed once, outside the
    # kernel, in f32.
    w_eff = (w1.astype(jnp.float32) @ w2.astype(jnp.float32)).reshape(1, HIDDEN)
    b_eff = (b1.astype(jnp.float32) @ w2.astype(jnp.float32)
             + b2.astype(jnp.float32)).reshape(1, 1)

    # bf16 embeddings: halves the HBM traffic of the (input-DMA-bound) kernel.
    e1b = e1.astype(jnp.bfloat16)
    e2b = e2.astype(jnp.bfloat16)

    # Batch-tiled grid.  Tile is a multiple of 16 rows (bf16 sublane packing);
    # the default 1024-row tile keeps 2 inputs x 2 double-buffers at ~6.3 MiB,
    # comfortably inside the scoped-VMEM default on v5e/v6e and v7x's 64 MiB.
    tb = max(16, min(_round_up(block_b, 16), _round_up(B, 16)))
    num_blocks = pl.cdiv(B, tb)
    b_pad = num_blocks * tb
    if b_pad != B:
        e1b = jnp.pad(e1b, ((0, b_pad - B), (0, 0)))
        e2b = jnp.pad(e2b, ((0, b_pad - B), (0, 0)))

    out = pl.pallas_call(
        siamese_head_kernel,
        out_shape=jax.ShapeDtypeStruct((b_pad, OUT), jnp.float32),
        grid_spec=pltpu.PrefetchScalarGridSpec(
            num_scalar_prefetch=0,
            grid=(num_blocks,),
            in_specs=[
                pl.BlockSpec((tb, HIDDEN), lambda i: (i, 0)),   # e1 tile
                pl.BlockSpec((tb, HIDDEN), lambda i: (i, 0)),   # e2 tile
                # Fused weight row: same block every step -> stays VMEM-resident.
                pl.BlockSpec((1, HIDDEN), lambda i: (0, 0)),
                # Fused bias: one f32 scalar, kept in SMEM (no VMEM tile / DMA).
                pl.BlockSpec((1, 1), lambda i: (0, 0),
                             memory_space=pltpu.MemorySpace.SMEM),
            ],
            out_specs=pl.BlockSpec((tb, OUT), lambda i: (i, 0)),
        ),
        compiler_params=pltpu.CompilerParams(
            dimension_semantics=("parallel",)),
    )(e1b, e2b, w_eff, b_eff)
    return out[:B]


def init_params(key):
    """Deterministic init matching the PyTorch module's layer shapes.

    Stored as (in_features, out_features); PyTorch Linear stores (out, in).
    """
    k1, k2, k3, k4 = jax.random.split(key, 4)
    w1 = jax.random.uniform(k1, (HIDDEN, MID), jnp.float32, -0.036, 0.036)
    b1 = jax.random.uniform(k2, (1, MID), jnp.float32, -0.036, 0.036)
    w2 = jax.random.uniform(k3, (MID, OUT), jnp.float32, -0.07, 0.07)
    b2 = jax.random.uniform(k4, (1, OUT), jnp.float32, -0.07, 0.07)
    return w1, b1, w2, b2


if __name__ == "__main__":
    key = jax.random.PRNGKey(0)
    k_e1, k_e2, k_p = jax.random.split(key, 3)

    B = 8  # small batch of sentence pairs for the smoke test
    # TODO(synk): SentenceTransformer('bert-base-nli-mean-tokens') is an
    # external pretrained encoder; stand in deterministic pseudo-embeddings.
    e1 = jax.random.normal(k_e1, (B, HIDDEN), jnp.float32)
    e2 = jax.random.normal(k_e2, (B, HIDDEN), jnp.float32)

    w1, b1, w2, b2 = init_params(k_p)

    out = siamese_bert_forward(e1, e2, w1, b1, w2, b2)
    out = jax.block_until_ready(out)

    # Reference in plain JAX, with the same bf16 rounding of the embeddings
    # that the kernel's input DMA applies (all arithmetic in f32).
    e1r = e1.astype(jnp.bfloat16).astype(jnp.float32)
    e2r = e2.astype(jnp.bfloat16).astype(jnp.float32)
    d = (e1r - e2r) ** 2
    ref = jax.nn.sigmoid((d @ w1 + b1) @ w2 + b2)

    assert out.shape == (B, OUT)
    assert jnp.allclose(out, ref, atol=1e-4, rtol=1e-3)

    print("KERNEL_OK")
</pallas_src>

<mosaic_0001>
module attributes {stable_mosaic.version = 11 : i64} {
  func.func @siamese_head_kernel(%arg0: i32, %arg1: memref<16x768xbf16, #tpu.memory_space<vmem>>, %arg2: memref<16x768xbf16, #tpu.memory_space<vmem>>, %arg3: memref<1x768xf32, #tpu.memory_space<vmem>>, %arg4: memref<1x1xf32, #tpu.memory_space<smem>>, %arg5: memref<16x1xf32, #tpu.memory_space<vmem>>) attributes {dimension_semantics = [#tpu.dimension_semantics<parallel>], iteration_bounds = array<i64: 1>, scalar_prefetch = 0 : i64, scratch_operands = 0 : i64, tpu.core_type = #tpu.core_type<tc>, window_params = [{transform_indices = @transform_0, window_bounds = array<i64: 16, 768>}, {transform_indices = @transform_1, window_bounds = array<i64: 16, 768>}, {pipeline_mode = #tpu.pipeline_mode<synchronous>, transform_indices = @transform_2, window_bounds = array<i64: 1, 768>}, {transform_indices = @transform_3, window_bounds = array<i64: 1, 1>}, {transform_indices = @transform_4, window_bounds = array<i64: 16, 1>}]} {
    %c0 = arith.constant 0 : index
    %c0_0 = arith.constant 0 : index
    %0 = vector.load %arg1[%c0, %c0_0] : memref<16x768xbf16, #tpu.memory_space<vmem>>, vector<16x768xbf16>
    %1 = arith.extf %0 : vector<16x768xbf16> to vector<16x768xf32>
    %c0_1 = arith.constant 0 : index
    %c0_2 = arith.constant 0 : index
    %2 = vector.load %arg2[%c0_1, %c0_2] : memref<16x768xbf16, #tpu.memory_space<vmem>>, vector<16x768xbf16>
    %3 = arith.extf %2 : vector<16x768xbf16> to vector<16x768xf32>
    %4 = arith.subf %1, %3 : vector<16x768xf32>
    %5 = arith.mulf %4, %4 : vector<16x768xf32>
    %c0_3 = arith.constant 0 : index
    %c0_4 = arith.constant 0 : index
    %6 = vector.load %arg3[%c0_3, %c0_4] : memref<1x768xf32, #tpu.memory_space<vmem>>, vector<1x768xf32>
    %7 = vector.broadcast %6 : vector<1x768xf32> to vector<16x768xf32>
    %8 = arith.mulf %5, %7 : vector<16x768xf32>
    %cst = arith.constant dense<0.000000e+00> : vector<16xf32>
    %9 = vector.multi_reduction <add>, %8, %cst [1] : vector<16x768xf32> to vector<16xf32>
    %10 = vector.shape_cast %9 : vector<16xf32> to vector<16x1xf32>
    %c0_5 = arith.constant 0 : index
    %c0_6 = arith.constant 0 : index
    %11 = memref.load %arg4[%c0_5, %c0_6] : memref<1x1xf32, #tpu.memory_space<smem>>
    %12 = vector.broadcast %11 : f32 to vector<16x1xf32>
    %13 = arith.addf %10, %12 : vector<16x1xf32>
    %14 = arith.negf %13 : vector<16x1xf32>
    %15 = math.exp %14 : vector<16x1xf32>
    %cst_7 = arith.constant 1.000000e+00 : f32
    %16 = vector.broadcast %cst_7 : f32 to vector<16x1xf32>
    %17 = arith.addf %16, %15 : vector<16x1xf32>
    %18 = arith.divf %16, %17 : vector<16x1xf32>
    %c0_8 = arith.constant 0 : index
    %c0_9 = arith.constant 0 : index
    %19 = vector.load %arg5[%c0_8, %c0_9] : memref<16x1xf32, #tpu.memory_space<vmem>>, vector<16x1xf32>
    tpu.vector_store %arg5[%c0_8, %c0_9], %18 {strides = array<i32>} : memref<16x1xf32, #tpu.memory_space<vmem>>, vector<16x1xf32>,
    return
  }
  func.func @transform_0(%arg0: i32) -> (i32, i32) {
    %c0_i32 = arith.constant 0 : i32
    %c0_i32_0 = arith.constant 0 : i32
    return %arg0, %c0_i32 : i32, i32
  }
  func.func @transform_1(%arg0: i32) -> (i32, i32) {
    %c0_i32 = arith.constant 0 : i32
    %c0_i32_0 = arith.constant 0 : i32
    return %arg0, %c0_i32 : i32, i32
  }
  func.func @transform_2(%arg0: i32) -> (i32, i32) {
    %c0_i32 = arith.constant 0 : i32
    %c0_i32_0 = arith.constant 0 : i32
    %c0_i32_1 = arith.constant 0 : i32
    return %c0_i32, %c0_i32_0 : i32, i32
  }
  func.func @transform_3(%arg0: i32) -> (i32, i32) {
    %c0_i32 = arith.constant 0 : i32
    %c0_i32_0 = arith.constant 0 : i32
    %c0_i32_1 = arith.constant 0 : i32
    return %c0_i32, %c0_i32_0 : i32, i32
  }
  func.func @transform_4(%arg0: i32) -> (i32, i32) {
    %c0_i32 = arith.constant 0 : i32
    %c0_i32_0 = arith.constant 0 : i32
    return %arg0, %c0_i32 : i32, i32
  }
}

</mosaic_0001>

<llo_original>
// kernel: tpu_custom_call.1
$region0: #{tpu_custom_call.1}
  #allocation0 [shape = 'u32[]', space=smem, size = 0x4, offset = 0x4, fixed_abs, tag = 'smem constant byte address 0x4 - core index']
  #allocation1 [shape = 'u32[144,128]{1,0:T(1,128)}', space=vmem, size = 0x12000, scoped, tag = 'internal scratch']
  #allocation2 [shape = 'f32[1,1]{1,0:T(1,128)S(6)}', space=smem, size = 0x200, scoped, tag = 'scoped memory for tpu_custom_call.1']
  %s0 = inlined_call_operand.hbm [shape: bf16[16,768], index: 0, kind: input, shape index: {}]
  %s1 = inlined_call_operand.hbm [shape: bf16[16,768], index: 1, kind: input, shape index: {}]
  %s2 = inlined_call_operand.vmem [shape: f32[1,768], index: 2, kind: input, shape index: {}]
  %s3 = inlined_call_operand.<no memory space> [shape: f32[1,1], index: 3, kind: input, shape index: {}]
  %s4 = inlined_call_operand.vmem [shape: f32[16,1], index: 4, kind: output, shape index: {}]
  %s5 = sld [smem:[#allocation0]]
  $region34: #{tpu_custom_call.1} parent=0
    _
  %s7 = ssub.s32 1, %s5
  %s8 = scalar_select 0, %s7, %s5
  %9 = sst [smem:[#allocation2]] %s3
  $region1: #{tpu_custom_call.1} parent=0
    #allocation3 [shape = 'u8[24576]{0}', space=vmem, size = 0x6000, scoped, tag = 'input window, operand 0, single buffered']
    #allocation4 [shape = 's32[1]{0}', space=sflag, size = 0x4, scoped, tag = 'scoped memory for tpu_custom_call.1']
    #allocation5 [shape = 'u8[24576]{0}', space=vmem, size = 0x6000, scoped, tag = 'input window, operand 1, single buffered']
    #allocation6 [shape = 's32[1]{0}', space=sflag, size = 0x4, scoped, tag = 'scoped memory for tpu_custom_call.1']
    %10 = vsyncpa [#allocation4], 0
    %11 = vsyncpa [#allocation6], 0
    // Predicated region
    $region2: #{tpu_custom_call.1} parent=1 // pred_check
      _
    $region3: #{tpu_custom_call.1} parent=1 // pred_check_branch
      %13 = sbr.rel (0) target = $region5
    $region4: #{tpu_custom_call.1} parent=1 // pred_region
      %s15 = ssub.s32 768, 768
      %16 = vsyncadd [#allocation4], %s15
      %s17 = sshll.u32 [#allocation3], 4
      %s18 = int_to_ptr.vmem [resolvable:$true] %s17
      %23 = dma.hbm_to_vmem [thread:$0]  %s0, 768, %s18, [#allocation4], 384, 384, 24
    $region5: #{tpu_custom_call.1} parent=1 // pred_fallthru
      _
    // Predicated region
    $region6: #{tpu_custom_call.1} parent=1 // pred_check
      _
    $region7: #{tpu_custom_call.1} parent=1 // pred_check_branch
      %25 = sbr.rel (0) target = $region9
    $region8: #{tpu_custom_call.1} parent=1 // pred_region
      %s27 = ssub.s32 768, 768
      %28 = vsyncadd [#allocation6], %s27
      %s29 = sshll.u32 [#allocation5], 4
      %s30 = int_to_ptr.vmem [resolvable:$true] %s29
      %35 = dma.hbm_to_vmem [thread:$0]  %s1, 768, %s30, [#allocation6], 384, 384, 24
    $region9: #{tpu_custom_call.1} parent=1 // pred_fallthru
      _
    // Predicated region
    $region10: #{tpu_custom_call.1} parent=1 // pred_check
      _
    $region11: #{tpu_custom_call.1} parent=1 // pred_check_branch
      %37 = sbr.rel (0) target = $region13
    $region12: #{tpu_custom_call.1} parent=1 // pred_region
      _
    $region13: #{tpu_custom_call.1} parent=1 // pred_fallthru
      _
    // Predicated region
    $region14: #{tpu_custom_call.1} parent=1 // pred_check
      _
    $region15: #{tpu_custom_call.1} parent=1 // pred_check_branch
      %39 = sbr.rel (0) target = $region17
    $region16: #{tpu_custom_call.1} parent=1 // pred_region
      _
    $region17: #{tpu_custom_call.1} parent=1 // pred_fallthru
      _
    // Predicated region
    $region18: #{tpu_custom_call.1} parent=1 // pred_check
      _
    $region19: #{tpu_custom_call.1} parent=1 // pred_check_branch
      %41 = sbr.rel (0) target = $region21
    $region20: #{tpu_custom_call.1} parent=1 // pred_region
      %42 = dma.done [#allocation4], 768
    $region21: #{tpu_custom_call.1} parent=1 // pred_fallthru
      _
    // Predicated region
    $region22: #{tpu_custom_call.1} parent=1 // pred_check
      _
    $region23: #{tpu_custom_call.1} parent=1 // pred_check_branch
      %44 = sbr.rel (0) target = $region25
    $region24: #{tpu_custom_call.1} parent=1 // pred_region
      %45 = dma.done [#allocation6], 768
    $region25: #{tpu_custom_call.1} parent=1 // pred_fallthru
      _
    %v46 = vld [vmem:[#allocation3] sm:$0xff]
    %v47 = vld [vmem:[#allocation3 + $0x8] sm:$0xff]
    %v48 = vld [vmem:[#allocation3 + $0x10] sm:$0xff]
    %v49 = vld [vmem:[#allocation3 + $0x18] sm:$0xff]
    %v50 = vld [vmem:[#allocation3 + $0x20] sm:$0xff]
    %v51 = vld [vmem:[#allocation3 + $0x28] sm:$0xff]
    %v52 = vunpack.c.l.bf16 %v46
    %v53 = vunpack.c.h.bf16 %v46
    %v54 = vunpack.c.l.bf16 %v47
    %v55 = vunpack.c.h.bf16 %v47
    %v56 = vunpack.c.l.bf16 %v48
    %v57 = vunpack.c.h.bf16 %v48
    %v58 = vunpack.c.l.bf16 %v49
    %v59 = vunpack.c.h.bf16 %v49
    %v60 = vunpack.c.l.bf16 %v50
    %v61 = vunpack.c.h.bf16 %v50
    %v62 = vunpack.c.l.bf16 %v51
    %v63 = vunpack.c.h.bf16 %v51
    %v64 = vld [vmem:[#allocation5] sm:$0xff]
    %v65 = vld [vmem:[#allocation5 + $0x8] sm:$0xff]
    %v66 = vld [vmem:[#allocation5 + $0x10] sm:$0xff]
    %v67 = vld [vmem:[#allocation5 + $0x18] sm:$0xff]
    %v68 = vld [vmem:[#allocation5 + $0x20] sm:$0xff]
    %v69 = vld [vmem:[#allocation5 + $0x28] sm:$0xff]
    %v70 = vunpack.c.l.bf16 %v64
    %v71 = vunpack.c.h.bf16 %v64
    %v72 = vunpack.c.l.bf16 %v65
    %v73 = vunpack.c.h.bf16 %v65
    %v74 = vunpack.c.l.bf16 %v66
    %v75 = vunpack.c.h.bf16 %v66
    %v76 = vunpack.c.l.bf16 %v67
    %v77 = vunpack.c.h.bf16 %v67
    %v78 = vunpack.c.l.bf16 %v68
    %v79 = vunpack.c.h.bf16 %v68
    %v80 = vunpack.c.l.bf16 %v69
    %v81 = vunpack.c.h.bf16 %v69
    %v82 = vsub.f32 %v52, %v70
    %v83 = vsub.f32 %v53, %v71
    %v84 = vsub.f32 %v54, %v72
    %v85 = vsub.f32 %v55, %v73
    %v86 = vsub.f32 %v56, %v74
    %v87 = vsub.f32 %v57, %v75
    %v88 = vsub.f32 %v58, %v76
    %v89 = vsub.f32 %v59, %v77
    %v90 = vsub.f32 %v60, %v78
    %v91 = vsub.f32 %v61, %v79
    %v92 = vsub.f32 %v62, %v80
    %v93 = vsub.f32 %v63, %v81
    %v94 = vmul.f32 %v82, %v82
    %v95 = vmul.f32 %v83, %v83
    %v96 = vmul.f32 %v84, %v84
    %v97 = vmul.f32 %v85, %v85
    %v98 = vmul.f32 %v86, %v86
    %v99 = vmul.f32 %v87, %v87
    %v100 = vmul.f32 %v88, %v88
    %v101 = vmul.f32 %v89, %v89
    %v102 = vmul.f32 %v90, %v90
    %v103 = vmul.f32 %v91, %v91
    %v104 = vmul.f32 %v92, %v92
    %v105 = vmul.f32 %v93, %v93
    %v106 = vld [vmem:[%s2] sm:$0x3f]
    %v108 = vlaneseq
    %v109 = vshrl.u32 %v108, 7
    %v110 = vsub.s32 0, %v109
    %v111 = vrot.slane %v106, %v110
    %v112 = vlaneseq
    %v113 = vshrl.u32 %v112, 7
    %v114 = vsub.s32 1, %v113
    %v115 = vrot.slane %v106, %v114
    %v116 = vlaneseq
    %v117 = vshrl.u32 %v116, 7
    %v118 = vsub.s32 2, %v117
    %v119 = vrot.slane %v106, %v118
    %v120 = vlaneseq
    %v121 = vshrl.u32 %v120, 7
    %v122 = vsub.s32 3, %v121
    %v123 = vrot.slane %v106, %v122
    %v124 = vlaneseq
    %v125 = vshrl.u32 %v124, 7
    %v126 = vsub.s32 4, %v125
    %v127 = vrot.slane %v106, %v126
    %v128 = vlaneseq
    %v129 = vshrl.u32 %v128, 7
    %v130 = vsub.s32 5, %v129
    %v131 = vrot.slane %v106, %v130
    %v138 = vmul.f32 %v94, %v111
    %v139 = vmul.f32 %v95, %v115
    %v140 = vmul.f32 %v96, %v119
    %v141 = vmul.f32 %v97, %v123
    %v142 = vmul.f32 %v98, %v127
    %v143 = vmul.f32 %v99, %v131
    %v144 = vmul.f32 %v100, %v111
    %v145 = vmul.f32 %v101, %v115
    %v146 = vmul.f32 %v102, %v119
    %v147 = vmul.f32 %v103, %v123
    %v148 = vmul.f32 %v104, %v127
    %v149 = vmul.f32 %v105, %v131
    %v150 = vadd.f32 %v138, %v139
    %v151 = vadd.f32 %v150, %v140
    %v152 = vadd.f32 %v151, %v141
    %v153 = vadd.f32 %v152, %v142
    %v154 = vadd.f32 %v153, %v143
    %155 = vadd.xlane.f32.xlu0 %v154
    %v156 = vpop.xlane.xlu0 %155
    %v157 = vadd.f32 %v144, %v145
    %v158 = vadd.f32 %v157, %v146
    %v159 = vadd.f32 %v158, %v147
    %v160 = vadd.f32 %v159, %v148
    %v161 = vadd.f32 %v160, %v149
    %162 = vadd.xlane.f32.xlu0 %v161
    %v163 = vpop.xlane.xlu0 %162
    %s164 = sld [smem:[#allocation2]]
    %v165 = vstv %s164
    %v166 = vadd.f32 %v156, %v165
    %v167 = vadd.f32 %v163, %v165
    %v168 = vxor.u32 %v166, 2147483648
    %v169 = vxor.u32 %v167, 2147483648
    %v170 = vmul.f32 %v168, 1.442695
    %v171 = vpow.pop %v170
    %v172 = vmul.f32 %v169, 1.442695
    %v173 = vpow.pop %v172
    %v174 = vadd.f32 %v171, 1.0
    %v175 = vadd.f32 %v173, 1.0
    %v176 = vrcp.pop %v174
    %v177 = vmul.f32 1.0, %v176
    %v178 = vrcp.pop %v175
    %v179 = vmul.f32 1.0, %v178
    %vm180 = vcmask 7168
    %181 = vst.msk [vmem:[%s4] sm:$0xff] %vm180, %v177
    %182 = vst.msk [vmem:[%s4 + $0x8] sm:$0xff] %vm180, %v179
    // Predicated region
    $region26: #{tpu_custom_call.1} parent=1 // pred_check
      _
    $region27: #{tpu_custom_call.1} parent=1 // pred_check_branch
      %184 = sbr.rel (0) target = $region29
    $region28: #{tpu_custom_call.1} parent=1 // pred_region
      _
    $region29: #{tpu_custom_call.1} parent=1 // pred_fallthru
      _
    // Predicated region
    $region30: #{tpu_custom_call.1} parent=1 // pred_check
      _
    $region31: #{tpu_custom_call.1} parent=1 // pred_check_branch
      %186 = sbr.rel (0) target = $region33
    $region32: #{tpu_custom_call.1} parent=1 // pred_region
      _
    $region33: #{tpu_custom_call.1} parent=1 // pred_fallthru
      _
    %187 = vsyncpa [#allocation4], 1
    %188 = vsyncpa [#allocation6], 1

</llo_original>
